<compile_context>
chip_gen: v7x
topology: tpu7x:2x2x1
jax: 0.10.0
libtpu: 0.0.40
codegen_flags: <defaults>
</compile_context>

<pallas_src>
import functools

import jax
import jax.numpy as jnp
from jax.experimental import pallas as pl
from jax.experimental.pallas import tpu as pltpu


def _fused_mlp_kernel(*refs, n_layers):
    """Fused MLP: chain of (x @ W + b) layers, sigmoid on the last one.

    refs = (x_ref, w0_ref, b0_ref, w1_ref, b1_ref, ..., o_ref)
    """
    x_ref = refs[0]
    o_ref = refs[-1]
    wb_refs = refs[1:-1]

    h = x_ref[...].astype(jnp.float32)
    for li in range(n_layers):
        w = wb_refs[2 * li][...]
        b = wb_refs[2 * li + 1][...]          # (1, N) row, broadcasts over batch
        h = jnp.dot(h, w, preferred_element_type=jnp.float32) + b
        # TODO(synk): training-mode dropout (p=0.5) between hidden layers omitted
        # (eval-mode identity); ReLU is defined in the module but never used.
    o_ref[...] = jax.nn.sigmoid(h).astype(o_ref.dtype)


def gcn_forward(params, x, *, tm=None):
    """Single fused Pallas call reproducing GCN.forward (eval mode).

    params: list of (W, b) with W: [in, out], b: [out]; x: [M, input_size].
    """
    M, K = x.shape
    n_layers = len(params)
    n_out = params[-1][0].shape[1]
    assert params[0][0].shape[0] == K, (params[0][0].shape, K)

    # Batch tile: whole batch in one grid step for small M; cap at 512 rows for
    # large M (keeps double-buffered x/out tiles far under v7x's 64 MiB VMEM).
    if tm is None:
        tm = M if M <= 512 else 512
    tm = max(8, -(-tm // 8) * 8)              # multiple of 8 sublanes
    n_tiles = pl.cdiv(M, tm)
    m_pad = n_tiles * tm
    x_in = x if m_pad == M else jnp.pad(x, ((0, m_pad - M), (0, 0)))

    # Flatten params; biases become (1, N) rows so everything is 2-D in VMEM.
    flat_inputs = []
    wb_specs = []
    for w, b in params:
        kin, kout = w.shape
        flat_inputs.append(w)
        wb_specs.append(pl.BlockSpec((kin, kout), lambda i: (0, 0)))   # resident
        flat_inputs.append(b.reshape(1, kout))
        wb_specs.append(pl.BlockSpec((1, kout), lambda i: (0, 0)))     # resident

    kernel = functools.partial(_fused_mlp_kernel, n_layers=n_layers)

    out = pl.pallas_call(
        kernel,
        out_shape=jax.ShapeDtypeStruct((m_pad, n_out), x.dtype),
        grid_spec=pltpu.PrefetchScalarGridSpec(
            num_scalar_prefetch=0,
            grid=(n_tiles,),
            in_specs=[pl.BlockSpec((tm, K), lambda i: (i, 0))] + wb_specs,
            out_specs=pl.BlockSpec((tm, n_out), lambda i: (i, 0)),
        ),
        compiler_params=pltpu.CompilerParams(
            dimension_semantics=("parallel",)),
    )(x_in, *flat_inputs)

    return out[:M] if m_pad != M else out


def init_gcn_params(key, input_size, hidden_sizes, output_size):
    """Deterministic init mirroring nn.Linear's U(-1/sqrt(in), 1/sqrt(in))."""
    sizes = [input_size] + list(hidden_sizes) + [output_size]
    params = []
    for fan_in, fan_out in zip(sizes[:-1], sizes[1:]):
        key, kw, kb = jax.random.split(key, 3)
        bound = 1.0 / jnp.sqrt(jnp.float32(fan_in))
        w = jax.random.uniform(kw, (fan_in, fan_out), jnp.float32, -bound, bound)
        b = jax.random.uniform(kb, (fan_out,), jnp.float32, -bound, bound)
        params.append((w, b))
    return params


def _jax_reference(params, x):
    h = x
    for w, b in params[:-1]:
        h = h @ w + b
    w, b = params[-1]
    return jax.nn.sigmoid(h @ w + b)


if __name__ == "__main__":
    # Small shapes consistent with the module's forward:
    # batch=16, input_size=32, hidden_sizes=[64, 32], output_size=16.
    batch = 16
    input_size = 32
    hidden_sizes = [64, 32]
    output_size = 16

    key = jax.random.PRNGKey(0)
    key, kx = jax.random.split(key)
    x = jax.random.normal(kx, (batch, input_size), jnp.float32)

    params = init_gcn_params(key, input_size, hidden_sizes, output_size)

    out = gcn_forward(params, x)
    out = jax.block_until_ready(out)

    # Sanity: correct shape and sigmoid range.
    assert out.shape == (batch, output_size), out.shape
    assert bool(jnp.all((out >= 0.0) & (out <= 1.0)))

    # Cross-check against a plain-JAX reference of the same forward pass.
    ref = _jax_reference(params, x)
    assert bool(jnp.allclose(out, ref, atol=1e-5, rtol=1e-5))

    # Robustness: batch not a multiple of 8 (cdiv + padded last tile).
    x_odd = jax.random.normal(jax.random.PRNGKey(1), (10, input_size), jnp.float32)
    out_odd = jax.block_until_ready(gcn_forward(params, x_odd))
    assert out_odd.shape == (10, output_size), out_odd.shape
    assert bool(jnp.allclose(out_odd, _jax_reference(params, x_odd),
                             atol=1e-5, rtol=1e-5))

    print("KERNEL_OK")
</pallas_src>

<mosaic_0001>
module attributes {stable_mosaic.version = 11 : i64} {
  func.func @_fused_mlp_kernel(%arg0: i32, %arg1: memref<16x32xf32, #tpu.memory_space<vmem>>, %arg2: memref<32x64xf32, #tpu.memory_space<vmem>>, %arg3: memref<1x64xf32, #tpu.memory_space<vmem>>, %arg4: memref<64x32xf32, #tpu.memory_space<vmem>>, %arg5: memref<1x32xf32, #tpu.memory_space<vmem>>, %arg6: memref<32x16xf32, #tpu.memory_space<vmem>>, %arg7: memref<1x16xf32, #tpu.memory_space<vmem>>, %arg8: memref<16x16xf32, #tpu.memory_space<vmem>>) attributes {dimension_semantics = [#tpu.dimension_semantics<parallel>], iteration_bounds = array<i64: 1>, scalar_prefetch = 0 : i64, scratch_operands = 0 : i64, tpu.core_type = #tpu.core_type<tc>, window_params = [{transform_indices = @transform_0, window_bounds = array<i64: 16, 32>}, {pipeline_mode = #tpu.pipeline_mode<synchronous>, transform_indices = @transform_1, window_bounds = array<i64: 32, 64>}, {pipeline_mode = #tpu.pipeline_mode<synchronous>, transform_indices = @transform_2, window_bounds = array<i64: 1, 64>}, {pipeline_mode = #tpu.pipeline_mode<synchronous>, transform_indices = @transform_3, window_bounds = array<i64: 64, 32>}, {pipeline_mode = #tpu.pipeline_mode<synchronous>, transform_indices = @transform_4, window_bounds = array<i64: 1, 32>}, {pipeline_mode = #tpu.pipeline_mode<synchronous>, transform_indices = @transform_5, window_bounds = array<i64: 32, 16>}, {pipeline_mode = #tpu.pipeline_mode<synchronous>, transform_indices = @transform_6, window_bounds = array<i64: 1, 16>}, {transform_indices = @transform_7, window_bounds = array<i64: 16, 16>}]} {
    %c0 = arith.constant 0 : index
    %c0_0 = arith.constant 0 : index
    %0 = vector.load %arg1[%c0, %c0_0] : memref<16x32xf32, #tpu.memory_space<vmem>>, vector<16x32xf32>
    %c0_1 = arith.constant 0 : index
    %c0_2 = arith.constant 0 : index
    %1 = vector.load %arg2[%c0_1, %c0_2] : memref<32x64xf32, #tpu.memory_space<vmem>>, vector<32x64xf32>
    %c0_3 = arith.constant 0 : index
    %c0_4 = arith.constant 0 : index
    %2 = vector.load %arg3[%c0_3, %c0_4] : memref<1x64xf32, #tpu.memory_space<vmem>>, vector<1x64xf32>
    %cst = arith.constant dense<0.000000e+00> : vector<16x64xf32>
    %3 = tpu.matmul %0, %1, %cst {dimension_numbers = #tpu.dot_dimension_numbers<[1], [0], [0], [1], [0, 0, 1, 1], [], []>} : vector<16x32xf32>, vector<32x64xf32>, vector<16x64xf32> -> vector<16x64xf32>
    %4 = vector.broadcast %2 : vector<1x64xf32> to vector<16x64xf32>
    %5 = arith.addf %3, %4 : vector<16x64xf32>
    %c0_5 = arith.constant 0 : index
    %c0_6 = arith.constant 0 : index
    %6 = vector.load %arg4[%c0_5, %c0_6] : memref<64x32xf32, #tpu.memory_space<vmem>>, vector<64x32xf32>
    %c0_7 = arith.constant 0 : index
    %c0_8 = arith.constant 0 : index
    %7 = vector.load %arg5[%c0_7, %c0_8] : memref<1x32xf32, #tpu.memory_space<vmem>>, vector<1x32xf32>
    %cst_9 = arith.constant dense<0.000000e+00> : vector<16x32xf32>
    %8 = tpu.matmul %5, %6, %cst_9 {dimension_numbers = #tpu.dot_dimension_numbers<[1], [0], [0], [1], [0, 0, 1, 1], [], []>} : vector<16x64xf32>, vector<64x32xf32>, vector<16x32xf32> -> vector<16x32xf32>
    %9 = vector.broadcast %7 : vector<1x32xf32> to vector<16x32xf32>
    %10 = arith.addf %8, %9 : vector<16x32xf32>
    %c0_10 = arith.constant 0 : index
    %c0_11 = arith.constant 0 : index
    %11 = vector.load %arg6[%c0_10, %c0_11] : memref<32x16xf32, #tpu.memory_space<vmem>>, vector<32x16xf32>
    %c0_12 = arith.constant 0 : index
    %c0_13 = arith.constant 0 : index
    %12 = vector.load %arg7[%c0_12, %c0_13] : memref<1x16xf32, #tpu.memory_space<vmem>>, vector<1x16xf32>
    %cst_14 = arith.constant dense<0.000000e+00> : vector<16x16xf32>
    %13 = tpu.matmul %10, %11, %cst_14 {dimension_numbers = #tpu.dot_dimension_numbers<[1], [0], [0], [1], [0, 0, 1, 1], [], []>} : vector<16x32xf32>, vector<32x16xf32>, vector<16x16xf32> -> vector<16x16xf32>
    %14 = vector.broadcast %12 : vector<1x16xf32> to vector<16x16xf32>
    %15 = arith.addf %13, %14 : vector<16x16xf32>
    %16 = arith.negf %15 : vector<16x16xf32>
    %17 = math.exp %16 : vector<16x16xf32>
    %cst_15 = arith.constant 1.000000e+00 : f32
    %18 = vector.broadcast %cst_15 : f32 to vector<16x16xf32>
    %19 = arith.addf %18, %17 : vector<16x16xf32>
    %20 = arith.divf %18, %19 : vector<16x16xf32>
    %c0_16 = arith.constant 0 : index
    %c0_17 = arith.constant 0 : index
    %21 = vector.load %arg8[%c0_16, %c0_17] : memref<16x16xf32, #tpu.memory_space<vmem>>, vector<16x16xf32>
    tpu.vector_store %arg8[%c0_16, %c0_17], %20 {strides = array<i32>} : memref<16x16xf32, #tpu.memory_space<vmem>>, vector<16x16xf32>,
    return
  }
  func.func @transform_0(%arg0: i32) -> (i32, i32) {
    %c0_i32 = arith.constant 0 : i32
    %c0_i32_0 = arith.constant 0 : i32
    return %arg0, %c0_i32 : i32, i32
  }
  func.func @transform_1(%arg0: i32) -> (i32, i32) {
    %c0_i32 = arith.constant 0 : i32
    %c0_i32_0 = arith.constant 0 : i32
    %c0_i32_1 = arith.constant 0 : i32
    return %c0_i32, %c0_i32_0 : i32, i32
  }
  func.func @transform_2(%arg0: i32) -> (i32, i32) {
    %c0_i32 = arith.constant 0 : i32
    %c0_i32_0 = arith.constant 0 : i32
    %c0_i32_1 = arith.constant 0 : i32
    return %c0_i32, %c0_i32_0 : i32, i32
  }
  func.func @transform_3(%arg0: i32) -> (i32, i32) {
    %c0_i32 = arith.constant 0 : i32
    %c0_i32_0 = arith.constant 0 : i32
    %c0_i32_1 = arith.constant 0 : i32
    return %c0_i32, %c0_i32_0 : i32, i32
  }
  func.func @transform_4(%arg0: i32) -> (i32, i32) {
    %c0_i32 = arith.constant 0 : i32
    %c0_i32_0 = arith.constant 0 : i32
    %c0_i32_1 = arith.constant 0 : i32
    return %c0_i32, %c0_i32_0 : i32, i32
  }
  func.func @transform_5(%arg0: i32) -> (i32, i32) {
    %c0_i32 = arith.constant 0 : i32
    %c0_i32_0 = arith.constant 0 : i32
    %c0_i32_1 = arith.constant 0 : i32
    return %c0_i32, %c0_i32_0 : i32, i32
  }
  func.func @transform_6(%arg0: i32) -> (i32, i32) {
    %c0_i32 = arith.constant 0 : i32
    %c0_i32_0 = arith.constant 0 : i32
    %c0_i32_1 = arith.constant 0 : i32
    return %c0_i32, %c0_i32_0 : i32, i32
  }
  func.func @transform_7(%arg0: i32) -> (i32, i32) {
    %c0_i32 = arith.constant 0 : i32
    %c0_i32_0 = arith.constant 0 : i32
    return %arg0, %c0_i32 : i32, i32
  }
}

</mosaic_0001>

<llo_original>
// kernel: tpu_custom_call.1
$region0: #{tpu_custom_call.1}
  #allocation0 [shape = 'u32[]', space=smem, size = 0x4, offset = 0x4, fixed_abs, tag = 'smem constant byte address 0x4 - core index']
  #allocation1 [shape = 'u32[144,128]{1,0:T(1,128)}', space=vmem, size = 0x12000, scoped, tag = 'internal scratch']
  %s0 = inlined_call_operand.vmem [shape: f32[16,32], index: 0, kind: input, shape index: {}]
  %s1 = inlined_call_operand.vmem [shape: f32[32,64], index: 1, kind: input, shape index: {}]
  %s2 = inlined_call_operand.vmem [shape: f32[1,64], index: 2, kind: input, shape index: {}]
  %s3 = inlined_call_operand.vmem [shape: f32[64,32], index: 3, kind: input, shape index: {}]
  %s4 = inlined_call_operand.vmem [shape: f32[1,32], index: 4, kind: input, shape index: {}]
  %s5 = inlined_call_operand.vmem [shape: f32[32,16], index: 5, kind: input, shape index: {}]
  %s6 = inlined_call_operand.vmem [shape: f32[1,16], index: 6, kind: input, shape index: {}]
  %s7 = inlined_call_operand.hbm [shape: f32[16,16], index: 7, kind: output, shape index: {}]
  %s8 = sld [smem:[#allocation0]]
  $region38: #{tpu_custom_call.1} parent=0
    _
  %s10 = ssub.s32 1, %s8
  %s11 = scalar_select 0, %s10, %s8
  $region1: #{tpu_custom_call.1} parent=0
    #allocation2 [shape = 'u8[8192]{0}', space=vmem, size = 0x2000, scoped, tag = 'output window, operand 0, single buffered']
    #allocation3 [shape = 's32[1]{0}', space=sflag, size = 0x4, scoped, tag = 'scoped memory for tpu_custom_call.1']
    %12 = vsyncpa [#allocation3], 0
    // Predicated region
    $region2: #{tpu_custom_call.1} parent=1 // pred_check
      _
    $region3: #{tpu_custom_call.1} parent=1 // pred_check_branch
      %14 = sbr.rel (0) target = $region5
    $region4: #{tpu_custom_call.1} parent=1 // pred_region
      _
    $region5: #{tpu_custom_call.1} parent=1 // pred_fallthru
      _
    // Predicated region
    $region6: #{tpu_custom_call.1} parent=1 // pred_check
      _
    $region7: #{tpu_custom_call.1} parent=1 // pred_check_branch
      %16 = sbr.rel (0) target = $region9
    $region8: #{tpu_custom_call.1} parent=1 // pred_region
      _
    $region9: #{tpu_custom_call.1} parent=1 // pred_fallthru
      _
    // Predicated region
    $region10: #{tpu_custom_call.1} parent=1 // pred_check
      _
    $region11: #{tpu_custom_call.1} parent=1 // pred_check_branch
      %18 = sbr.rel (0) target = $region13
    $region12: #{tpu_custom_call.1} parent=1 // pred_region
      _
    $region13: #{tpu_custom_call.1} parent=1 // pred_fallthru
      _
    // Predicated region
    $region14: #{tpu_custom_call.1} parent=1 // pred_check
      _
    $region15: #{tpu_custom_call.1} parent=1 // pred_check_branch
      %20 = sbr.rel (0) target = $region17
    $region16: #{tpu_custom_call.1} parent=1 // pred_region
      _
    $region17: #{tpu_custom_call.1} parent=1 // pred_fallthru
      _
    // Predicated region
    $region18: #{tpu_custom_call.1} parent=1 // pred_check
      _
    $region19: #{tpu_custom_call.1} parent=1 // pred_check_branch
      %22 = sbr.rel (0) target = $region21
    $region20: #{tpu_custom_call.1} parent=1 // pred_region
      _
    $region21: #{tpu_custom_call.1} parent=1 // pred_fallthru
      _
    // Predicated region
    $region22: #{tpu_custom_call.1} parent=1 // pred_check
      _
    $region23: #{tpu_custom_call.1} parent=1 // pred_check_branch
      %24 = sbr.rel (0) target = $region25
    $region24: #{tpu_custom_call.1} parent=1 // pred_region
      _
    $region25: #{tpu_custom_call.1} parent=1 // pred_fallthru
      _
    // Predicated region
    $region26: #{tpu_custom_call.1} parent=1 // pred_check
      _
    $region27: #{tpu_custom_call.1} parent=1 // pred_check_branch
      %26 = sbr.rel (0) target = $region29
    $region28: #{tpu_custom_call.1} parent=1 // pred_region
      _
    $region29: #{tpu_custom_call.1} parent=1 // pred_fallthru
      _
    %v27 = vld [vmem:[%s0] sm:$0xff]
    %v28 = vld [vmem:[%s0 + $0x8] sm:$0xff]
    %v29 = vld [vmem:[%s1] sm:$0xff]
    %v30 = vld [vmem:[%s1 + $0x8] sm:$0xff]
    %v31 = vld [vmem:[%s1 + $0x10] sm:$0xff]
    %v32 = vld [vmem:[%s1 + $0x18] sm:$0xff]
    %v33 = vld [vmem:[%s2] sm:$0x1]
    %v35 = vlaneseq
    %v36 = vshrl.u32 %v35, 7
    %v37 = vsub.s32 0, %v36
    %v38 = vrot.slane %v33, %v37
    %vm40 = vcmask 261120
    %v42 = vsel %vm40, %v27, 0
    %v45 = vsel %vm40, %v28, 0
    %47 = vmatprep.subr.mxu0 0.0
    %48 = vmatpush1.msra.mxu0 %v29
    %49 = vmatprep.subr.mxu0 0.0
    %50 = vmatpush1.msra.mxu0 %v30
    %51 = vmatprep.subr.mxu0 0.0
    %52 = vmatpush1.msra.mxu0 %v31
    %53 = vmatprep.subr.mxu0 0.0
    %54 = vmatpush1.msra.mxu0 %v32
    %55 = vmatprep.subr.mxu0 0.0
    %56 = vmatpush1.msra.mxu0 0.0
    %57 = vmatprep.subr.mxu0 0.0
    %58 = vmatpush1.msra.mxu0 0.0
    %59 = vmatprep.subr.mxu0 0.0
    %60 = vmatpush1.msra.mxu0 0.0
    %61 = vmatprep.subr.mxu0 0.0
    %62 = vmatpush1.msra.mxu0 0.0
    %63 = vmatprep.subr.mxu0 0.0
    %64 = vmatpush1.msra.mxu0 0.0
    %65 = vmatprep.subr.mxu0 0.0
    %66 = vmatpush1.msra.mxu0 0.0
    %67 = vmatprep.subr.mxu0 0.0
    %68 = vmatpush1.msra.mxu0 0.0
    %69 = vmatprep.subr.mxu0 0.0
    %70 = vmatpush1.msra.mxu0 0.0
    %71 = vmatprep.subr.mxu0 0.0
    %72 = vmatpush1.msra.mxu0 0.0
    %73 = vmatprep.subr.mxu0 0.0
    %74 = vmatpush1.msra.mxu0 0.0
    %75 = vmatprep.subr.mxu0 0.0
    %76 = vmatpush1.msra.mxu0 0.0
    %77 = vmatprep.subr.mxu0 0.0
    %78 = vmatpush1.msra.mxu0 0.0
    %79 = vmatprep.subr.mxu0 0.0
    %80 = vmatpush1.msra.mxu0 0.0
    %81 = vmatprep.subr.mxu0 0.0
    %82 = vmatpush1.msra.mxu0 0.0
    %83 = vmatprep.subr.mxu0 0.0
    %84 = vmatpush1.msra.mxu0 0.0
    %85 = vmatprep.subr.mxu0 0.0
    %86 = vmatpush1.msra.mxu0 0.0
    %87 = vmatprep.subr.mxu0 0.0
    %88 = vmatpush1.msra.mxu0 0.0
    %89 = vmatprep.subr.mxu0 0.0
    %90 = vmatpush1.msra.mxu0 0.0
    %91 = vmatprep.subr.mxu0 0.0
    %92 = vmatpush1.msra.mxu0 0.0
    %93 = vmatprep.subr.mxu0 0.0
    %94 = vmatpush1.msra.mxu0 0.0
    %95 = vmatprep.subr.mxu0 0.0
    %96 = vmatpush1.msra.mxu0 0.0
    %97 = vmatprep.subr.mxu0 0.0
    %98 = vmatpush1.msra.mxu0 0.0
    %99 = vmatprep.subr.mxu0 0.0
    %100 = vmatpush1.msra.mxu0 0.0
    %101 = vmatprep.subr.mxu0 0.0
    %102 = vmatpush1.msra.mxu0 0.0
    %103 = vmatprep.subr.mxu0 0.0
    %104 = vmatpush1.msra.mxu0 0.0
    %105 = vmatprep.subr.mxu0 0.0
    %106 = vmatpush1.msra.mxu0 0.0
    %107 = vmatprep.subr.mxu0 0.0
    %108 = vmatpush1.msra.mxu0 0.0
    %109 = vmatprep.subr.mxu0 0.0
    %110 = vmatpush1.msra.mxu0 0.0
    %111 = vmatprep.mubr.f32.mxu0 0.0
    %112 = vmatmul.mubr.f32.gmra.mrb[0].mxu0 %v42
    %v113 = vpop.f32.mrb[0].mxu0
    %v114 = vadd.f32 %v38, %v113
    %v115 = vpop.f32.mrb[0].mxu0
    %116 = vmatprep.mubr.f32.mxu0 0.0
    %117 = vmatmul.mubr.f32.gmra.mrb[0].mxu0 %v45
    %v118 = vpop.f32.mrb[0].mxu0
    %v119 = vadd.f32 %v38, %v118
    %v120 = vpop.f32.mrb[0].mxu0
    %121 = vdwg.mxu0
    %v122 = vld [vmem:[%s3] sm:$0xff]
    %v123 = vld [vmem:[%s3 + $0x8] sm:$0xff]
    %v124 = vld [vmem:[%s3 + $0x10] sm:$0xff]
    %v125 = vld [vmem:[%s3 + $0x18] sm:$0xff]
    %v126 = vld [vmem:[%s3 + $0x20] sm:$0xff]
    %v127 = vld [vmem:[%s3 + $0x28] sm:$0xff]
    %v128 = vld [vmem:[%s3 + $0x30] sm:$0xff]
    %v129 = vld [vmem:[%s3 + $0x38] sm:$0xff]
    %v130 = vld [vmem:[%s4] sm:$0x1]
    %v132 = vlaneseq
    %v133 = vshrl.u32 %v132, 7
    %v134 = vsub.s32 0, %v133
    %v135 = vrot.slane %v130, %v134
    %vm137 = vcmask 523264
    %v139 = vsel %vm137, %v114, 0
    %v142 = vsel %vm137, %v119, 0
    %144 = vmatprep.subr.mxu0 0.0
    %145 = vmatpush1.msra.mxu0 %v122
    %146 = vmatprep.subr.mxu0 0.0
    %147 = vmatpush1.msra.mxu0 %v123
    %148 = vmatprep.subr.mxu0 0.0
    %149 = vmatpush1.msra.mxu0 %v124
    %150 = vmatprep.subr.mxu0 0.0
    %151 = vmatpush1.msra.mxu0 %v125
    %152 = vmatprep.subr.mxu0 0.0
    %153 = vmatpush1.msra.mxu0 %v126
    %154 = vmatprep.subr.mxu0 0.0
    %155 = vmatpush1.msra.mxu0 %v127
    %156 = vmatprep.subr.mxu0 0.0
    %157 = vmatpush1.msra.mxu0 %v128
    %158 = vmatprep.subr.mxu0 0.0
    %159 = vmatpush1.msra.mxu0 %v129
    %160 = vmatprep.subr.mxu0 0.0
    %161 = vmatpush1.msra.mxu0 0.0
    %162 = vmatprep.subr.mxu0 0.0
    %163 = vmatpush1.msra.mxu0 0.0
    %164 = vmatprep.subr.mxu0 0.0
    %165 = vmatpush1.msra.mxu0 0.0
    %166 = vmatprep.subr.mxu0 0.0
    %167 = vmatpush1.msra.mxu0 0.0
    %168 = vmatprep.subr.mxu0 0.0
    %169 = vmatpush1.msra.mxu0 0.0
    %170 = vmatprep.subr.mxu0 0.0
    %171 = vmatpush1.msra.mxu0 0.0
    %172 = vmatprep.subr.mxu0 0.0
    %173 = vmatpush1.msra.mxu0 0.0
    %174 = vmatprep.subr.mxu0 0.0
    %175 = vmatpush1.msra.mxu0 0.0
    %176 = vmatprep.subr.mxu0 0.0
    %177 = vmatpush1.msra.mxu0 0.0
    %178 = vmatprep.subr.mxu0 0.0
    %179 = vmatpush1.msra.mxu0 0.0
    %180 = vmatprep.subr.mxu0 0.0
    %181 = vmatpush1.msra.mxu0 0.0
    %182 = vmatprep.subr.mxu0 0.0
    %183 = vmatpush1.msra.mxu0 0.0
    %184 = vmatprep.subr.mxu0 0.0
    %185 = vmatpush1.msra.mxu0 0.0
    %186 = vmatprep.subr.mxu0 0.0
    %187 = vmatpush1.msra.mxu0 0.0
    %188 = vmatprep.subr.mxu0 0.0
    %189 = vmatpush1.msra.mxu0 0.0
    %190 = vmatprep.subr.mxu0 0.0
    %191 = vmatpush1.msra.mxu0 0.0
    %192 = vmatprep.subr.mxu0 0.0
    %193 = vmatpush1.msra.mxu0 0.0
    %194 = vmatprep.subr.mxu0 0.0
    %195 = vmatpush1.msra.mxu0 0.0
    %196 = vmatprep.subr.mxu0 0.0
    %197 = vmatpush1.msra.mxu0 0.0
    %198 = vmatprep.subr.mxu0 0.0
    %199 = vmatpush1.msra.mxu0 0.0
    %200 = vmatprep.subr.mxu0 0.0
    %201 = vmatpush1.msra.mxu0 0.0
    %202 = vmatprep.subr.mxu0 0.0
    %203 = vmatpush1.msra.mxu0 0.0
    %204 = vmatprep.subr.mxu0 0.0
    %205 = vmatpush1.msra.mxu0 0.0
    %206 = vmatprep.subr.mxu0 0.0
    %207 = vmatpush1.msra.mxu0 0.0
    %208 = vmatprep.mubr.f32.mxu0 0.0
    %209 = vmatmul.mubr.f32.gmra.mrb[0].mxu0 %v139
    %v210 = vpop.f32.mrb[0].mxu0
    %v211 = vadd.f32 %v135, %v210
    %v212 = vpop.f32.mrb[0].mxu0
    %213 = vmatprep.mubr.f32.mxu0 0.0
    %214 = vmatmul.mubr.f32.gmra.mrb[0].mxu0 %v142
    %v215 = vpop.f32.mrb[0].mxu0
    %v216 = vadd.f32 %v135, %v215
    %v217 = vpop.f32.mrb[0].mxu0
    %218 = vdwg.mxu0
    %v219 = vld [vmem:[%s5] sm:$0xff]
    %v220 = vld [vmem:[%s5 + $0x8] sm:$0xff]
    %v221 = vld [vmem:[%s5 + $0x10] sm:$0xff]
    %v222 = vld [vmem:[%s5 + $0x18] sm:$0xff]
    %v223 = vld [vmem:[%s6] sm:$0x1]
    %v225 = vlaneseq
    %v226 = vshrl.u32 %v225, 7
    %v227 = vsub.s32 0, %v226
    %v228 = vrot.slane %v223, %v227
    %v231 = vsel %vm40, %v211, 0
    %v234 = vsel %vm40, %v216, 0
    %236 = vmatprep.subr.mxu0 0.0
    %237 = vmatpush1.msra.mxu0 %v219
    %238 = vmatprep.subr.mxu0 0.0
    %239 = vmatpush1.msra.mxu0 %v220
    %240 = vmatprep.subr.mxu0 0.0
    %241 = vmatpush1.msra.mxu0 %v221
    %242 = vmatprep.subr.mxu0 0.0
    %243 = vmatpush1.msra.mxu0 %v222
    %244 = vmatprep.subr.mxu0 0.0
    %245 = vmatpush1.msra.mxu0 0.0
    %246 = vmatprep.subr.mxu0 0.0
    %247 = vmatpush1.msra.mxu0 0.0
    %248 = vmatprep.subr.mxu0 0.0
    %249 = vmatpush1.msra.mxu0 0.0
    %250 = vmatprep.subr.mxu0 0.0
    %251 = vmatpush1.msra.mxu0 0.0
    %252 = vmatprep.subr.mxu0 0.0
    %253 = vmatpush1.msra.mxu0 0.0
    %254 = vmatprep.subr.mxu0 0.0
    %255 = vmatpush1.msra.mxu0 0.0
    %256 = vmatprep.subr.mxu0 0.0
    %257 = vmatpush1.msra.mxu0 0.0
    %258 = vmatprep.subr.mxu0 0.0
    %259 = vmatpush1.msra.mxu0 0.0
    %260 = vmatprep.subr.mxu0 0.0
    %261 = vmatpush1.msra.mxu0 0.0
    %262 = vmatprep.subr.mxu0 0.0
    %263 = vmatpush1.msra.mxu0 0.0
    %264 = vmatprep.subr.mxu0 0.0
    %265 = vmatpush1.msra.mxu0 0.0
    %266 = vmatprep.subr.mxu0 0.0
    %267 = vmatpush1.msra.mxu0 0.0
    %268 = vmatprep.subr.mxu0 0.0
    %269 = vmatpush1.msra.mxu0 0.0
    %270 = vmatprep.subr.mxu0 0.0
    %271 = vmatpush1.msra.mxu0 0.0
    %272 = vmatprep.subr.mxu0 0.0
    %273 = vmatpush1.msra.mxu0 0.0
    %274 = vmatprep.subr.mxu0 0.0
    %275 = vmatpush1.msra.mxu0 0.0
    %276 = vmatprep.subr.mxu0 0.0
    %277 = vmatpush1.msra.mxu0 0.0
    %278 = vmatprep.subr.mxu0 0.0
    %279 = vmatpush1.msra.mxu0 0.0
    %280 = vmatprep.subr.mxu0 0.0
    %281 = vmatpush1.msra.mxu0 0.0
    %282 = vmatprep.subr.mxu0 0.0
    %283 = vmatpush1.msra.mxu0 0.0
    %284 = vmatprep.subr.mxu0 0.0
    %285 = vmatpush1.msra.mxu0 0.0
    %286 = vmatprep.subr.mxu0 0.0
    %287 = vmatpush1.msra.mxu0 0.0
    %288 = vmatprep.subr.mxu0 0.0
    %289 = vmatpush1.msra.mxu0 0.0
    %290 = vmatprep.subr.mxu0 0.0
    %291 = vmatpush1.msra.mxu0 0.0
    %292 = vmatprep.subr.mxu0 0.0
    %293 = vmatpush1.msra.mxu0 0.0
    %294 = vmatprep.subr.mxu0 0.0
    %295 = vmatpush1.msra.mxu0 0.0
    %296 = vmatprep.subr.mxu0 0.0
    %297 = vmatpush1.msra.mxu0 0.0
    %298 = vmatprep.subr.mxu0 0.0
    %299 = vmatpush1.msra.mxu0 0.0
    %300 = vmatprep.mubr.f32.mxu0 0.0
    %301 = vmatmul.mubr.f32.gmra.mrb[0].mxu0 %v231
    %v302 = vpop.f32.mrb[0].mxu0
    %v303 = vadd.f32 %v228, %v302
    %v304 = vpop.f32.mrb[0].mxu0
    %305 = vmatprep.mubr.f32.mxu0 0.0
    %306 = vmatmul.mubr.f32.gmra.mrb[0].mxu0 %v234
    %v307 = vpop.f32.mrb[0].mxu0
    %v308 = vadd.f32 %v228, %v307
    %v309 = vpop.f32.mrb[0].mxu0
    %310 = vdwg.mxu0
    %v311 = vxor.u32 %v303, 2147483648
    %v312 = vxor.u32 %v308, 2147483648
    %v313 = vmul.f32 %v311, 1.442695
    %v314 = vpow.pop %v313
    %v315 = vmul.f32 %v312, 1.442695
    %v316 = vpow.pop %v315
    %v317 = vadd.f32 %v314, 1.0
    %v318 = vadd.f32 %v316, 1.0
    %v319 = vrcp.pop %v317
    %v320 = vmul.f32 1.0, %v319
    %v321 = vrcp.pop %v318
    %v322 = vmul.f32 1.0, %v321
    %vm323 = vcmask 130048
    %324 = vst.msk [vmem:[#allocation2] sm:$0xff] %vm323, %v320
    %325 = vst.msk [vmem:[#allocation2 + $0x8] sm:$0xff] %vm323, %v322
    // Predicated region
    $region30: #{tpu_custom_call.1} parent=1 // pred_check
      _
    $region31: #{tpu_custom_call.1} parent=1 // pred_check_branch
      %327 = sbr.rel (0) target = $region33
    $region32: #{tpu_custom_call.1} parent=1 // pred_region
      %s329 = ssub.s32 256, 256
      %330 = vsyncadd [#allocation3], %s329
      %s331 = sshll.u32 [#allocation2], 4
      %s332 = int_to_ptr.vmem [resolvable:$true] %s331
      %337 = dma.vmem_to_hbm [thread:$0]  %s332, 256, %s7, [#allocation3], 128, 128, 8
    $region33: #{tpu_custom_call.1} parent=1 // pred_fallthru
      _
    // Predicated region
    $region34: #{tpu_custom_call.1} parent=1 // pred_check
      _
    $region35: #{tpu_custom_call.1} parent=1 // pred_check_branch
      %339 = sbr.rel (0) target = $region37
    $region36: #{tpu_custom_call.1} parent=1 // pred_region
      %340 = dma.done [#allocation3], 256
    $region37: #{tpu_custom_call.1} parent=1 // pred_fallthru
      _
    %341 = vsyncpa [#allocation3], 1

</llo_original>
